<compile_context>
chip_gen: v6e
topology: v6e:2x2x1
jax: 0.10.0
libtpu: 0.0.40
codegen_flags: <defaults>
</compile_context>

<pallas_src>
import functools

import jax
import jax.numpy as jnp
from jax.experimental import pallas as pl
from jax.experimental.pallas import tpu as pltpu


def _distill_kernel(s_ref, t_ref, kl_ref, sq_ref, *,
                    temperature, apply_temp, hw, tile, tiles_per_split,
                    needs_mask):
    """One grid step = one batch element x one spatial split x one lane tile.

    s_ref, t_ref : (C, TILE)  raw student / teacher logits (any float dtype)
    kl_ref       : (1, TILE)  running sum of sum_c p_t*(log p_t - log p_s)
    sq_ref       : (1, TILE)  running sum of sum_c (s - t)^2
    """
    p = pl.program_id(1)
    h = pl.program_id(2)

    @pl.when(h == 0)
    def _():
        kl_ref[...] = jnp.zeros_like(kl_ref)
        sq_ref[...] = jnp.zeros_like(sq_ref)

    s = s_ref[...].astype(jnp.float32)            # (C, TILE)
    t = t_ref[...].astype(jnp.float32)

    # --- residual: feeds both MSE and the KL numerator ----------------------
    d = s - t                                      # (C, TILE)
    sq = jnp.sum(d * d, axis=0, keepdims=True)     # (1, TILE)

    # --- class (KL) partial --------------------------------------------------
    max_s = jnp.max(s, axis=0, keepdims=True)      # (1, TILE)
    max_t = jnp.max(t, axis=0, keepdims=True)

    inv_t = jnp.float32(1.0 / temperature)
    if apply_temp:
        # shifted-and-scaled logits; s_shift is consumed immediately
        s_sum = jnp.sum(jnp.exp((s - max_s) * inv_t), axis=0, keepdims=True)
        t_exp = jnp.exp((t - max_t) * inv_t)
    else:
        s_sum = jnp.sum(jnp.exp(s - max_s), axis=0, keepdims=True)
        t_exp = jnp.exp(t - max_t)
    t_sum = jnp.sum(t_exp, axis=0, keepdims=True)  # (1, TILE)

    # sum_c t_exp * (t_shift - s_shift)
    #   with t_shift - s_shift = ((max_s - max_t) - d) [* 1/T]
    ted = jnp.sum(t_exp * d, axis=0, keepdims=True)
    num = (max_s - max_t) * t_sum - ted
    if apply_temp:
        num = num * inv_t

    inv_tsum = pl.reciprocal(t_sum)                # exact; tolerance-critical
    kl = num * inv_tsum + jnp.log(s_sum * inv_tsum)

    if needs_mask:
        lane = jax.lax.broadcasted_iota(jnp.int32, (1, tile), 1)
        col = (p * tiles_per_split + h) * tile + lane
        valid = col < hw
        kl = jnp.where(valid, kl, 0.0)
        sq = jnp.where(valid, sq, 0.0)

    kl_ref[...] += kl
    sq_ref[...] += sq


def _pick_hw_tile(hw, c, itemsize):
    """Largest lane tile (multiple of 128) within the VMEM working-set budget.

    Budget counts 2 inputs x 2 pipeline buffers of (C, TILE) input-dtype blocks
    plus ~6 live f32 (C, TILE) kernel temporaries.  Cap at 16k lanes so small-C
    heads amortize the fixed per-grid-step overhead.
    """
    if hw <= 128:
        return hw                                  # single full-width block
    budget = 20 << 20
    per_lane = c * (4 * int(itemsize) + 6 * 4)
    tile = budget // max(per_lane, 1)
    tile = max(128, (tile // 128) * 128)
    hw_rounded = -(-hw // 128) * 128
    return int(min(tile, 16384, hw_rounded))


def distill_loss_with_pixel(student_pred, teacher_pred, *,
                            temperature=1.0, loss_weight=1.0, pixel_weight=1.0):
    """Pallas TPU implementation of DistillLossWithPixel.forward (NCHW inputs)."""
    assert student_pred.shape == teacher_pred.shape
    n, c, hgt, wid = student_pred.shape
    hw = hgt * wid
    total_elems = n * c * hw

    s = student_pred.reshape(n, c, hw)
    t = teacher_pred.reshape(n, c, hw)

    itemsize = jnp.dtype(student_pred.dtype).itemsize
    tile = _pick_hw_tile(hw, c, itemsize)
    num_tiles = -(-hw // tile)                     # cdiv, no padding copy
    # Spatial "parallel" split so both v7x TensorCores work even when N == 1.
    n_split = 2 if (n == 1 and num_tiles >= 2) else 1
    tiles_per_split = -(-num_tiles // n_split)
    needs_mask = (n_split * tiles_per_split * tile) != hw
    max_blk = num_tiles - 1

    kernel = functools.partial(
        _distill_kernel,
        temperature=float(temperature),
        apply_temp=(float(temperature) != 1.0),
        hw=hw, tile=tile, tiles_per_split=tiles_per_split,
        needs_mask=needs_mask,
    )

    def in_map(b, p, h):
        # Clamp duplicate / overhanging block indices; their contributions are
        # fully masked inside the kernel.
        return (b, 0, jnp.minimum(p * tiles_per_split + h, max_blk))

    def out_map(b, p, h):
        return (b, p, 0, 0)

    kl_part, sq_part = pl.pallas_call(
        kernel,
        out_shape=(
            jax.ShapeDtypeStruct((n, n_split, 1, tile), jnp.float32),
            jax.ShapeDtypeStruct((n, n_split, 1, tile), jnp.float32),
        ),
        grid_spec=pltpu.PrefetchScalarGridSpec(
            num_scalar_prefetch=0,
            grid=(n, n_split, tiles_per_split),    # spatial reduction axis last
            in_specs=[
                pl.BlockSpec((pl.Squeezed(), c, tile), in_map),
                pl.BlockSpec((pl.Squeezed(), c, tile), in_map),
            ],
            out_specs=[
                pl.BlockSpec((pl.Squeezed(), pl.Squeezed(), 1, tile), out_map),
                pl.BlockSpec((pl.Squeezed(), pl.Squeezed(), 1, tile), out_map),
            ],
        ),
        compiler_params=pltpu.CompilerParams(
            dimension_semantics=("parallel", "parallel", "arbitrary"),
            vmem_limit_bytes=40 << 20,
        ),
    )(s, t)

    # Tiny trailing reductions over the lane-dense partials.
    kl_sum = jnp.sum(kl_part, dtype=jnp.float32)
    sq_sum = jnp.sum(sq_part, dtype=jnp.float32)
    class_loss = (kl_sum / jnp.float32(n)) * jnp.float32(temperature) ** 2
    pixel_loss = sq_sum / jnp.float32(total_elems)
    return (jnp.float32(loss_weight) * class_loss
            + jnp.float32(pixel_weight) * pixel_loss)


def _reference(student_pred, teacher_pred, temperature, loss_weight, pixel_weight):
    """Pure-JAX reference matching the PyTorch module."""
    n = student_pred.shape[0]
    log_p_s = jax.nn.log_softmax(student_pred / temperature, axis=1)
    p_t = jax.nn.softmax(teacher_pred / temperature, axis=1)
    log_p_t = jax.nn.log_softmax(teacher_pred / temperature, axis=1)
    kl = jnp.sum(p_t * (log_p_t - log_p_s)) / n          # reduction='batchmean'
    class_loss = kl * temperature ** 2
    pixel_loss = jnp.mean((student_pred - teacher_pred) ** 2)
    return loss_weight * class_loss + pixel_weight * pixel_loss


if __name__ == "__main__":
    # Module hyper-parameters (deterministic, from __init__ defaults).
    temperature = 1.0
    loss_weight = 1.0
    pixel_weight = 1.0

    key = jax.random.PRNGKey(0)
    k1, k2 = jax.random.split(key)
    n, c, hgt, wid = 2, 4, 16, 16
    student_pred = jax.random.normal(k1, (n, c, hgt, wid), dtype=jnp.float32)
    teacher_pred = jax.random.normal(k2, (n, c, hgt, wid), dtype=jnp.float32)

    loss = distill_loss_with_pixel(
        student_pred, teacher_pred,
        temperature=temperature, loss_weight=loss_weight, pixel_weight=pixel_weight,
    )
    loss = jax.block_until_ready(loss)

    ref = _reference(student_pred, teacher_pred, temperature, loss_weight, pixel_weight)
    ref = jax.block_until_ready(ref)

    assert jnp.allclose(loss, ref, rtol=1e-5, atol=1e-5), (loss, ref)
    print("KERNEL_OK")
</pallas_src>

<mosaic_0001>
module attributes {stable_mosaic.version = 11 : i64} {
  func.func @_distill_kernel(%arg0: i32, %arg1: i32, %arg2: i32, %arg3: memref<1x4x256xf32, #tpu.memory_space<vmem>>, %arg4: memref<1x4x256xf32, #tpu.memory_space<vmem>>, %arg5: memref<1x1x1x256xf32, #tpu.memory_space<vmem>>, %arg6: memref<1x1x1x256xf32, #tpu.memory_space<vmem>>) attributes {dimension_semantics = [#tpu.dimension_semantics<parallel>, #tpu.dimension_semantics<parallel>, #tpu.dimension_semantics<arbitrary>], iteration_bounds = array<i64: 2, 1, 1>, scalar_prefetch = 0 : i64, scratch_operands = 0 : i64, tpu.core_type = #tpu.core_type<tc>, window_params = [{transform_indices = @transform_0, window_bounds = array<i64: 1, 4, 256>}, {transform_indices = @transform_1, window_bounds = array<i64: 1, 4, 256>}, {transform_indices = @transform_2, window_bounds = array<i64: 1, 1, 1, 256>}, {transform_indices = @transform_3, window_bounds = array<i64: 1, 1, 1, 256>}]} {
    %c0_i32 = arith.constant 0 : i32
    %0 = arith.cmpi eq, %arg2, %c0_i32 : i32
    %1 = arith.extui %0 : i1 to i32
    %c0_i32_0 = arith.constant 0 : i32
    %2 = arith.cmpi ne, %1, %c0_i32_0 : i32
    scf.if %2 {
      %cst_27 = arith.constant 0.000000e+00 : f32
      %48 = vector.broadcast %cst_27 : f32 to vector<1x256xf32>
      %c0_28 = arith.constant 0 : index
      %c0_29 = arith.constant 0 : index
      %c0_30 = arith.constant 0 : index
      %c0_31 = arith.constant 0 : index
      %49 = vector.load %arg5[%c0_28, %c0_29, %c0_30, %c0_31] : memref<1x1x1x256xf32, #tpu.memory_space<vmem>>, vector<1x1x1x256xf32>
      %50 = vector.shape_cast %49 : vector<1x1x1x256xf32> to vector<1x256xf32>
      %51 = vector.shape_cast %48 : vector<1x256xf32> to vector<1x1x1x256xf32>
      tpu.vector_store %arg5[%c0_28, %c0_29, %c0_30, %c0_31], %51 {strides = array<i32>} : memref<1x1x1x256xf32, #tpu.memory_space<vmem>>, vector<1x1x1x256xf32>,
      %cst_32 = arith.constant 0.000000e+00 : f32
      %52 = vector.broadcast %cst_32 : f32 to vector<1x256xf32>
      %c0_33 = arith.constant 0 : index
      %c0_34 = arith.constant 0 : index
      %c0_35 = arith.constant 0 : index
      %c0_36 = arith.constant 0 : index
      %53 = vector.load %arg6[%c0_33, %c0_34, %c0_35, %c0_36] : memref<1x1x1x256xf32, #tpu.memory_space<vmem>>, vector<1x1x1x256xf32>
      %54 = vector.shape_cast %53 : vector<1x1x1x256xf32> to vector<1x256xf32>
      %55 = vector.shape_cast %52 : vector<1x256xf32> to vector<1x1x1x256xf32>
      tpu.vector_store %arg6[%c0_33, %c0_34, %c0_35, %c0_36], %55 {strides = array<i32>} : memref<1x1x1x256xf32, #tpu.memory_space<vmem>>, vector<1x1x1x256xf32>,
    } else {
    }
    %c0 = arith.constant 0 : index
    %c0_1 = arith.constant 0 : index
    %c0_2 = arith.constant 0 : index
    %3 = vector.load %arg3[%c0, %c0_1, %c0_2] : memref<1x4x256xf32, #tpu.memory_space<vmem>>, vector<1x4x256xf32>
    %4 = vector.shape_cast %3 : vector<1x4x256xf32> to vector<4x256xf32>
    %c0_3 = arith.constant 0 : index
    %c0_4 = arith.constant 0 : index
    %c0_5 = arith.constant 0 : index
    %5 = vector.load %arg4[%c0_3, %c0_4, %c0_5] : memref<1x4x256xf32, #tpu.memory_space<vmem>>, vector<1x4x256xf32>
    %6 = vector.shape_cast %5 : vector<1x4x256xf32> to vector<4x256xf32>
    %7 = arith.subf %4, %6 : vector<4x256xf32>
    %8 = arith.mulf %7, %7 : vector<4x256xf32>
    %cst = arith.constant dense<0.000000e+00> : vector<256xf32>
    %9 = vector.multi_reduction <add>, %8, %cst [0] : vector<4x256xf32> to vector<256xf32>
    %10 = vector.shape_cast %9 : vector<256xf32> to vector<1x256xf32>
    %cst_6 = arith.constant dense<0xFF800000> : vector<256xf32>
    %11 = vector.multi_reduction <maximumf>, %4, %cst_6 [0] : vector<4x256xf32> to vector<256xf32>
    %12 = vector.shape_cast %11 : vector<256xf32> to vector<1x256xf32>
    %cst_7 = arith.constant dense<0xFF800000> : vector<256xf32>
    %13 = vector.multi_reduction <maximumf>, %6, %cst_7 [0] : vector<4x256xf32> to vector<256xf32>
    %14 = vector.shape_cast %13 : vector<256xf32> to vector<1x256xf32>
    %15 = vector.broadcast %12 : vector<1x256xf32> to vector<4x256xf32>
    %16 = arith.subf %4, %15 : vector<4x256xf32>
    %17 = math.exp %16 : vector<4x256xf32>
    %cst_8 = arith.constant dense<0.000000e+00> : vector<256xf32>
    %18 = vector.multi_reduction <add>, %17, %cst_8 [0] : vector<4x256xf32> to vector<256xf32>
    %19 = vector.shape_cast %18 : vector<256xf32> to vector<1x256xf32>
    %20 = vector.broadcast %14 : vector<1x256xf32> to vector<4x256xf32>
    %21 = arith.subf %6, %20 : vector<4x256xf32>
    %22 = math.exp %21 : vector<4x256xf32>
    %cst_9 = arith.constant dense<0.000000e+00> : vector<256xf32>
    %23 = vector.multi_reduction <add>, %22, %cst_9 [0] : vector<4x256xf32> to vector<256xf32>
    %24 = vector.shape_cast %23 : vector<256xf32> to vector<1x256xf32>
    %25 = arith.mulf %22, %7 : vector<4x256xf32>
    %cst_10 = arith.constant dense<0.000000e+00> : vector<256xf32>
    %26 = vector.multi_reduction <add>, %25, %cst_10 [0] : vector<4x256xf32> to vector<256xf32>
    %27 = vector.shape_cast %26 : vector<256xf32> to vector<1x256xf32>
    %28 = arith.subf %12, %14 : vector<1x256xf32>
    %29 = arith.mulf %28, %24 : vector<1x256xf32>
    %30 = arith.subf %29, %27 : vector<1x256xf32>
    %31 = tpu.reciprocal %24 : vector<1x256xf32> -> vector<1x256xf32>
    %32 = arith.mulf %30, %31 : vector<1x256xf32>
    %33 = arith.mulf %19, %31 : vector<1x256xf32>
    %34 = math.log %33 : vector<1x256xf32>
    %35 = arith.addf %32, %34 : vector<1x256xf32>
    %c0_11 = arith.constant 0 : index
    %c0_12 = arith.constant 0 : index
    %c0_13 = arith.constant 0 : index
    %c0_14 = arith.constant 0 : index
    %36 = vector.load %arg5[%c0_11, %c0_12, %c0_13, %c0_14] : memref<1x1x1x256xf32, #tpu.memory_space<vmem>>, vector<1x1x1x256xf32>
    %37 = vector.shape_cast %36 : vector<1x1x1x256xf32> to vector<1x256xf32>
    %38 = arith.addf %37, %35 : vector<1x256xf32>
    %c0_15 = arith.constant 0 : index
    %c0_16 = arith.constant 0 : index
    %c0_17 = arith.constant 0 : index
    %c0_18 = arith.constant 0 : index
    %39 = vector.load %arg5[%c0_15, %c0_16, %c0_17, %c0_18] : memref<1x1x1x256xf32, #tpu.memory_space<vmem>>, vector<1x1x1x256xf32>
    %40 = vector.shape_cast %39 : vector<1x1x1x256xf32> to vector<1x256xf32>
    %41 = vector.shape_cast %38 : vector<1x256xf32> to vector<1x1x1x256xf32>
    tpu.vector_store %arg5[%c0_15, %c0_16, %c0_17, %c0_18], %41 {strides = array<i32>} : memref<1x1x1x256xf32, #tpu.memory_space<vmem>>, vector<1x1x1x256xf32>,
    %c0_19 = arith.constant 0 : index
    %c0_20 = arith.constant 0 : index
    %c0_21 = arith.constant 0 : index
    %c0_22 = arith.constant 0 : index
    %42 = vector.load %arg6[%c0_19, %c0_20, %c0_21, %c0_22] : memref<1x1x1x256xf32, #tpu.memory_space<vmem>>, vector<1x1x1x256xf32>
    %43 = vector.shape_cast %42 : vector<1x1x1x256xf32> to vector<1x256xf32>
    %44 = arith.addf %43, %10 : vector<1x256xf32>
    %c0_23 = arith.constant 0 : index
    %c0_24 = arith.constant 0 : index
    %c0_25 = arith.constant 0 : index
    %c0_26 = arith.constant 0 : index
    %45 = vector.load %arg6[%c0_23, %c0_24, %c0_25, %c0_26] : memref<1x1x1x256xf32, #tpu.memory_space<vmem>>, vector<1x1x1x256xf32>
    %46 = vector.shape_cast %45 : vector<1x1x1x256xf32> to vector<1x256xf32>
    %47 = vector.shape_cast %44 : vector<1x256xf32> to vector<1x1x1x256xf32>
    tpu.vector_store %arg6[%c0_23, %c0_24, %c0_25, %c0_26], %47 {strides = array<i32>} : memref<1x1x1x256xf32, #tpu.memory_space<vmem>>, vector<1x1x1x256xf32>,
    return
  }
  func.func @transform_0(%arg0: i32, %arg1: i32, %arg2: i32) -> (i32, i32, i32) {
    %c1_i32 = arith.constant 1 : i32
    %0 = arith.muli %arg1, %c1_i32 : i32
    %1 = arith.addi %0, %arg2 : i32
    %c0_i32 = arith.constant 0 : i32
    %2 = arith.minsi %1, %c0_i32 : i32
    %c0_i32_0 = arith.constant 0 : i32
    %c0_i32_1 = arith.constant 0 : i32
    return %arg0, %c0_i32_0, %2 : i32, i32, i32
  }
  func.func @transform_1(%arg0: i32, %arg1: i32, %arg2: i32) -> (i32, i32, i32) {
    %c1_i32 = arith.constant 1 : i32
    %0 = arith.muli %arg1, %c1_i32 : i32
    %1 = arith.addi %0, %arg2 : i32
    %c0_i32 = arith.constant 0 : i32
    %2 = arith.minsi %1, %c0_i32 : i32
    %c0_i32_0 = arith.constant 0 : i32
    %c0_i32_1 = arith.constant 0 : i32
    return %arg0, %c0_i32_0, %2 : i32, i32, i32
  }
  func.func @transform_2(%arg0: i32, %arg1: i32, %arg2: i32) -> (i32, i32, i32, i32) {
    %c0_i32 = arith.constant 0 : i32
    %c0_i32_0 = arith.constant 0 : i32
    %c0_i32_1 = arith.constant 0 : i32
    return %arg0, %arg1, %c0_i32, %c0_i32_0 : i32, i32, i32, i32
  }
  func.func @transform_3(%arg0: i32, %arg1: i32, %arg2: i32) -> (i32, i32, i32, i32) {
    %c0_i32 = arith.constant 0 : i32
    %c0_i32_0 = arith.constant 0 : i32
    %c0_i32_1 = arith.constant 0 : i32
    return %arg0, %arg1, %c0_i32, %c0_i32_0 : i32, i32, i32, i32
  }
}

</mosaic_0001>

<llo_original>
// kernel: tpu_custom_call.1
$region0: #{tpu_custom_call.1}
  #allocation0 [shape = 'u32[]', space=smem, size = 0x4, offset = 0x4, fixed_abs, tag = 'smem constant byte address 0x4 - core index']
  #allocation1 [shape = 'u32[144,128]{1,0:T(1,128)}', space=vmem, size = 0x12000, scoped, tag = 'internal scratch']
  %s0 = inlined_call_operand.hbm [shape: f32[2,4,256], index: 0, kind: input, shape index: {}]
  %s1 = inlined_call_operand.hbm [shape: f32[2,4,256], index: 1, kind: input, shape index: {}]
  %s2 = inlined_call_operand.hbm [shape: f32[2,1,1,256], index: 2, kind: output, shape index: {0}]
  %s3 = inlined_call_operand.hbm [shape: f32[2,1,1,256], index: 3, kind: output, shape index: {1}]
  %4 = xla_tuple %s2, %s3
  %s5 = sld [smem:[#allocation0]]
  $region61: #{tpu_custom_call.1} parent=0
    _
  %s7 = ssub.s32 1, %s5
  %s8 = scalar_select 0, %s7, %s5
  $region1: #{tpu_custom_call.1} parent=0
    #allocation2 [shape = 'u8[8192]{0}', space=vmem, size = 0x2000, scoped, tag = 'input window, operand 0']
    #allocation3 [shape = 's32[2]{0}', space=sflag, size = 0x8, scoped, tag = 'scoped memory for tpu_custom_call.1']
    #allocation4 [shape = 's32[2]{0}', space=sflag, size = 0x8, scoped, tag = 'scoped memory for tpu_custom_call.1']
    #allocation5 [shape = 'u8[8192]{0}', space=vmem, size = 0x2000, scoped, tag = 'input window, operand 1']
    #allocation6 [shape = 's32[2]{0}', space=sflag, size = 0x8, scoped, tag = 'scoped memory for tpu_custom_call.1']
    #allocation7 [shape = 'u8[2048]{0}', space=vmem, size = 0x800, scoped, tag = 'output window, operand 0']
    #allocation8 [shape = 'u8[2048]{0}', space=vmem, size = 0x800, scoped, tag = 'output window, operand 1']
    #allocation9 [shape = 's32[2]{0}', space=sflag, size = 0x8, scoped, tag = 'scoped memory for tpu_custom_call.1']
    %9 = vsyncpa [#allocation3], 0
    %s10 = scalar_lea.sflag [#allocation3], 1
    %11 = vsyncpa %s10, 0
    %12 = vsyncpa [#allocation6], 0
    %s13 = scalar_lea.sflag [#allocation6], 1
    %14 = vsyncpa %s13, 0
    %15 = vsyncpa [#allocation4], 0
    %s16 = scalar_lea.sflag [#allocation4], 1
    %17 = vsyncpa %s16, 0
    %18 = vsyncpa [#allocation9], 0
    %s19 = scalar_lea.sflag [#allocation9], 1
    %20 = vsyncpa %s19, 0
    loop: start=0, step=1, limit=4
    $region2: #{tpu_custom_call.1} parent=1 // loop_pre_header
      _
    $region3: #{tpu_custom_call.1} parent=1 // loop_header
      %s22 = sphi 0, %s26
      %p23 = scmp.ge.s32.totalorder %s22, 4
      %s29 = sphi 0, %s48
      %s30 = sphi 0, %s44
      %s31 = sphi 0, %s40
      %s32 = sphi 0, %s29
      %s33 = sphi 0, %s30
      %s34 = sphi 0, %s31
      %s35 = sphi 0, %s32
      %s36 = sphi 0, %s33
      %s37 = sphi 0, %s34
      %s59 = sphi 0, %s61
      %s62 = sphi 0, %s59
      %s63 = sphi 0, %s62
      %s79 = sphi 0, %s63
      %s93 = sphi 0, %s95
      %s96 = sphi 0, %s93
      %s97 = sphi 0, %s96
      %s113 = sphi 0, %s97
      %s121 = sphi 0, %s123
      %s124 = sphi 0, %s121
      %s125 = sphi 0, %s124
      %s141 = sphi 0, %s125
      %s149 = sphi 0, %s151
      %s152 = sphi 0, %s149
      %s153 = sphi 0, %s152
      %s169 = sphi 0, %s153
    $region4: #{tpu_custom_call.1} parent=1 // loop_header_branch
      %25 = sbr.rel (%p23) target = $region8
    $region5: #{tpu_custom_call.1} parent=1 // loop_body
      %s27 = ssub.s32 %s22, 1
      %s28 = ssub.s32 %s22, 2
      %s38 = sadd.s32 1, %s31
      %p39 = scmp.ge.s32.totalorder %s38, 1
      %s40 = scalar_select %p39, 0, %s38
      %s41 = sadd.s32 1, %s30
      %s42 = scalar_select %p39, %s41, %s30
      %p43 = scmp.ge.s32.totalorder %s42, 1
      %s44 = scalar_select %p43, 0, %s42
      %s45 = sadd.s32 1, %s29
      %s46 = scalar_select %p43, %s45, %s29
      %p47 = scmp.ge.s32.totalorder %s46, 2
      %s48 = scalar_select %p47, 0, %s46
      %s49 = sadd.s32 %s30, %s31
      %p50 = scmp.lt.s32.totalorder %s49, 0
      %s51 = scalar_select %p50, %s49, 0
      %s52 = sadd.s32 %s44, %s40
      %p53 = scmp.lt.s32.totalorder %s52, 0
      %s54 = scalar_select %p53, %s52, 0
      %s55 = ssub.s32 %s29, %s48
      %s56 = ssub.s32 %s51, %s54
      %s57 = sor.u32 %s55, %s56
      %p58 = scmp.eq.s32.totalorder %s57, 0
      %s60 = sadd.s32 %s59, 1
      %s61 = scalar_select %p58, %s59, %s60
      %p64 = pneg %p58
      %p65 = scmp.eq.s32.totalorder %s22, 1
      %p66 = por %p64, %p65
      %p67 = scmp.ne.s32.totalorder %s59, %s62
      %p68 = scmp.eq.s32.totalorder %s22, 0
      %p69 = por %p67, %p68
      %p70 = scmp.ne.s32.totalorder %s59, %s62
      %p71 = scmp.eq.s32.totalorder %s27, 1
      %p72 = por %p70, %p71
      %p73 = scmp.ne.s32.totalorder %s62, %s63
      %p74 = scmp.eq.s32.totalorder %s27, 0
      %p75 = por %p73, %p74
      %p76 = scmp.ne.s32.totalorder %s62, %s63
      %p77 = scmp.eq.s32.totalorder %s28, 1
      %p78 = por %p76, %p77
      %p80 = scmp.ne.s32.totalorder %s63, %s79
      %p81 = scmp.eq.s32.totalorder %s28, 0
      %p82 = por %p80, %p81
      %s83 = sadd.s32 %s30, %s31
      %p84 = scmp.lt.s32.totalorder %s83, 0
      %s85 = scalar_select %p84, %s83, 0
      %s86 = sadd.s32 %s44, %s40
      %p87 = scmp.lt.s32.totalorder %s86, 0
      %s88 = scalar_select %p87, %s86, 0
      %s89 = ssub.s32 %s29, %s48
      %s90 = ssub.s32 %s85, %s88
      %s91 = sor.u32 %s89, %s90
      %p92 = scmp.eq.s32.totalorder %s91, 0
      %s94 = sadd.s32 %s93, 1
      %s95 = scalar_select %p92, %s93, %s94
      %p98 = pneg %p92
      %p99 = scmp.eq.s32.totalorder %s22, 1
      %p100 = por %p98, %p99
      %p101 = scmp.ne.s32.totalorder %s93, %s96
      %p102 = scmp.eq.s32.totalorder %s22, 0
      %p103 = por %p101, %p102
      %p104 = scmp.ne.s32.totalorder %s93, %s96
      %p105 = scmp.eq.s32.totalorder %s27, 1
      %p106 = por %p104, %p105
      %p107 = scmp.ne.s32.totalorder %s96, %s97
      %p108 = scmp.eq.s32.totalorder %s27, 0
      %p109 = por %p107, %p108
      %p110 = scmp.ne.s32.totalorder %s96, %s97
      %p111 = scmp.eq.s32.totalorder %s28, 1
      %p112 = por %p110, %p111
      %p114 = scmp.ne.s32.totalorder %s97, %s113
      %p115 = scmp.eq.s32.totalorder %s28, 0
      %p116 = por %p114, %p115
      %s117 = ssub.s32 %s29, %s48
      %s118 = ssub.s32 %s30, %s44
      %s119 = sor.u32 %s117, %s118
      %p120 = scmp.eq.s32.totalorder %s119, 0
      %s122 = sadd.s32 %s121, 1
      %s123 = scalar_select %p120, %s121, %s122
      %p126 = pneg %p120
      %p127 = scmp.eq.s32.totalorder %s22, 1
      %p128 = por %p126, %p127
      %p129 = scmp.ne.s32.totalorder %s121, %s124
      %p130 = scmp.eq.s32.totalorder %s22, 0
      %p131 = por %p129, %p130
      %p132 = scmp.ne.s32.totalorder %s121, %s124
      %p133 = scmp.eq.s32.totalorder %s27, 1
      %p134 = por %p132, %p133
      %p135 = scmp.ne.s32.totalorder %s124, %s125
      %p136 = scmp.eq.s32.totalorder %s27, 0
      %p137 = por %p135, %p136
      %p138 = scmp.ne.s32.totalorder %s124, %s125
      %p139 = scmp.eq.s32.totalorder %s28, 1
      %p140 = por %p138, %p139
      %p142 = scmp.ne.s32.totalorder %s125, %s141
      %p143 = scmp.eq.s32.totalorder %s28, 0
      %p144 = por %p142, %p143
      %s145 = ssub.s32 %s29, %s48
      %s146 = ssub.s32 %s30, %s44
      %s147 = sor.u32 %s145, %s146
      %p148 = scmp.eq.s32.totalorder %s147, 0
      %s150 = sadd.s32 %s149, 1
      %s151 = scalar_select %p148, %s149, %s150
      %p154 = pneg %p148
      %p155 = scmp.eq.s32.totalorder %s22, 1
      %p156 = por %p154, %p155
      %p157 = scmp.ne.s32.totalorder %s149, %s152
      %p158 = scmp.eq.s32.totalorder %s22, 0
      %p159 = por %p157, %p158
      %p160 = scmp.ne.s32.totalorder %s149, %s152
      %p161 = scmp.eq.s32.totalorder %s27, 1
      %p162 = por %p160, %p161
      %p163 = scmp.ne.s32.totalorder %s152, %s153
      %p164 = scmp.eq.s32.totalorder %s27, 0
      %p165 = por %p163, %p164
      %p166 = scmp.ne.s32.totalorder %s152, %s153
      %p167 = scmp.eq.s32.totalorder %s28, 1
      %p168 = por %p166, %p167
      %p170 = scmp.ne.s32.totalorder %s153, %s169
      %p171 = scmp.eq.s32.totalorder %s28, 0
      %p172 = por %p170, %p171
      %p173 = scmp.le.s32.totalorder 1, %s22
      %p174 = scmp.lt.s32.totalorder %s22, 3
      %p175 = pnand %p173, %p174
      %p176 = pneg %p175
      // Predicated region
      $region9: #{tpu_custom_call.1} parent=5 // pred_check
        _
      $region10: #{tpu_custom_call.1} parent=5 // pred_check_branch
        %178 = sbr.rel (%p175) target = $region12
      $region11: #{tpu_custom_call.1} parent=5 // pred_region
        %s179 = ssub.s32 %s22, 1
      $region12: #{tpu_custom_call.1} parent=5 // pred_fallthru
        _
      %p180 = scmp.lt.s32.totalorder %s22, 2
      // Predicated region
      $region13: #{tpu_custom_call.1} parent=5 // pred_check
        %p181 = pneg %p180
      $region14: #{tpu_custom_call.1} parent=5 // pred_check_branch
        %183 = sbr.rel (%p181) target = $region16
      $region15: #{tpu_custom_call.1} parent=5 // pred_region
        // Predicated region
        $region17: #{tpu_custom_call.1} parent=15 // pred_check
          %p184 = pneg %p69
        $region18: #{tpu_custom_call.1} parent=15 // pred_check_branch
          %186 = sbr.rel (%p184) target = $region20
        $region19: #{tpu_custom_call.1} parent=15 // pred_region
          %s187 = sand.u32 %s59, 1
          %s188 = scalar_lea.sflag [#allocation3], %s187
          %s189 = sand.u32 %s59, 1
          %s190 = smul.addr %s189, 8
          %s191 = scalar_lea.vmem [#allocation2], %s190
          %s192 = sadd.s32 %s30, %s31
          %p193 = scmp.lt.s32.totalorder %s192, 0
          %s194 = scalar_select %p193, %s192, 0
          %s195 = smul.u32 2, %s194
          %s197 = ssub.s32 128, 128
          %198 = vsyncadd %s188, %s197
          %s199 = smul.addr %s29, 2
          %s200 = sadd.s32 %s195, %s199
          %s201 = smul.addr %s200, 64
          %s202 = scalar_lea.hbm %s0, %s201
          %s204 = sshll.u32 %s191, 4
          %s205 = int_to_ptr.vmem [resolvable:$true] %s204
          %207 = dma.hbm_to_vmem [thread:$0]  %s202, 128, %s205, %s188
        $region20: #{tpu_custom_call.1} parent=15 // pred_fallthru
          _
        // Predicated region
        $region21: #{tpu_custom_call.1} parent=15 // pred_check
          %p208 = pneg %p103
        $region22: #{tpu_custom_call.1} parent=15 // pred_check_branch
          %210 = sbr.rel (%p208) target = $region24
        $region23: #{tpu_custom_call.1} parent=15 // pred_region
          %s211 = sand.u32 %s93, 1
          %s212 = scalar_lea.sflag [#allocation6], %s211
          %s213 = sand.u32 %s93, 1
          %s214 = smul.addr %s213, 8
          %s215 = scalar_lea.vmem [#allocation5], %s214
          %s216 = sadd.s32 %s30, %s31
          %p217 = scmp.lt.s32.totalorder %s216, 0
          %s218 = scalar_select %p217, %s216, 0
          %s219 = smul.u32 2, %s218
          %s221 = ssub.s32 128, 128
          %222 = vsyncadd %s212, %s221
          %s223 = smul.addr %s29, 2
          %s224 = sadd.s32 %s219, %s223
          %s225 = smul.addr %s224, 64
          %s226 = scalar_lea.hbm %s1, %s225
          %s228 = sshll.u32 %s215, 4
          %s229 = int_to_ptr.vmem [resolvable:$true] %s228
          %231 = dma.hbm_to_vmem [thread:$0]  %s226, 128, %s229, %s212
        $region24: #{tpu_custom_call.1} parent=15 // pred_fallthru
          _
      $region16: #{tpu_custom_call.1} parent=5 // pred_fallthru
        _
      %p232 = scmp.le.s32.totalorder 1, %s22
      %p233 = scmp.lt.s32.totalorder %s22, 3
      %p234 = pnand %p232, %p233
      %p235 = pneg %p234
      // Predicated region
      $region25: #{tpu_custom_call.1} parent=5 // pred_check
        _
      $region26: #{tpu_custom_call.1} parent=5 // pred_check_branch
        %237 = sbr.rel (%p234) target = $region28
      $region27: #{tpu_custom_call.1} parent=5 // pred_region
        %s238 = ssub.s32 %s22, 1
        %s239 = sand.u32 %s62, 1
        %s240 = scalar_lea.sflag [#allocation3], %s239
        %s241 = sand.u32 %s62, 1
        %s242 = smul.addr %s241, 8
        %s243 = scalar_lea.vmem [#allocation2], %s242
        // Predicated region
        $region29: #{tpu_custom_call.1} parent=27 // pred_check
          %p244 = pneg %p75
        $region30: #{tpu_custom_call.1} parent=27 // pred_check_branch
          %246 = sbr.rel (%p244) target = $region32
        $region31: #{tpu_custom_call.1} parent=27 // pred_region
          %247 = dma.done %s240, 128
        $region32: #{tpu_custom_call.1} parent=27 // pred_fallthru
          _
        %s248 = sand.u32 %s96, 1
        %s249 = scalar_lea.sflag [#allocation6], %s248
        %s250 = sand.u32 %s96, 1
        %s251 = smul.addr %s250, 8
        %s252 = scalar_lea.vmem [#allocation5], %s251
        // Predicated region
        $region33: #{tpu_custom_call.1} parent=27 // pred_check
          %p253 = pneg %p109
        $region34: #{tpu_custom_call.1} parent=27 // pred_check_branch
          %255 = sbr.rel (%p253) target = $region36
        $region35: #{tpu_custom_call.1} parent=27 // pred_region
          %256 = dma.done %s249, 128
        $region36: #{tpu_custom_call.1} parent=27 // pred_fallthru
          _
        %s257 = sand.u32 %s62, 1
        %s258 = scalar_lea.sflag [#allocation3], %s257
        %s259 = sand.u32 %s62, 1
        %s260 = smul.addr %s259, 8
        %s261 = scalar_lea.vmem [#allocation2], %s260
        %p262 = pneg %p75
        %p263 = pneg %p72
        %s264 = sand.u32 %s96, 1
        %s265 = scalar_lea.sflag [#allocation6], %s264
        %s266 = sand.u32 %s96, 1
        %s267 = smul.addr %s266, 8
        %s268 = scalar_lea.vmem [#allocation5], %s267
        %p269 = pneg %p109
        %p270 = pneg %p106
        %p271 = pneg %p137
        %p272 = pneg %p134
        %s273 = sand.u32 %s124, 1
        %s274 = scalar_lea.sflag [#allocation4], %s273
        %s275 = sand.u32 %s124, 1
        %s276 = smul.addr %s275, 2
        %s277 = scalar_lea.vmem [#allocation7], %s276
        %p278 = pneg %p165
        %p279 = pneg %p162
        %s280 = sand.u32 %s152, 1
        %s281 = scalar_lea.sflag [#allocation9], %s280
        %s282 = sand.u32 %s152, 1
        %s283 = smul.addr %s282, 2
        %s284 = scalar_lea.vmem [#allocation8], %s283
        %s285 = sadd.s32 %s33, %s34
        %p286 = scmp.lt.s32.totalorder %s285, 0
        %s287 = scalar_select %p286, %s285, 0
        %s288 = smul.u32 2, %s287
        %s289 = sadd.s32 %s33, %s34
        %p290 = scmp.lt.s32.totalorder %s289, 0
        %s291 = scalar_select %p290, %s289, 0
        %s292 = smul.u32 2, %s291
        %p293 = scmp.eq.s32.totalorder %s34, 0
        // Predicated region
        $region37: #{tpu_custom_call.1} parent=27 // pred_check
          %p294 = pneg %p293
        $region38: #{tpu_custom_call.1} parent=27 // pred_check_branch
          %296 = sbr.rel (%p294) target = $region40
        $region39: #{tpu_custom_call.1} parent=27 // pred_region
          %v297 = vlaneseq
          %vm298 = vcmp.ge.s32.totalorder %v297, 0
          %vm299 = vcmp.lt.s32.totalorder %v297, 256
          %vm300 = vmand %vm298, %vm299
          %301 = vst.msk [vmem:[%s277] sm:$0x3] %vm300, 0.0
          %302 = vst.msk [vmem:[%s284] sm:$0x3] %vm300, 0.0
        $region40: #{tpu_custom_call.1} parent=27 // pred_fallthru
          _
        %v303 = vld [vmem:[%s243] sm:$0xff]
        %v304 = vld [vmem:[%s252] sm:$0xff]
        %v305 = vsub.f32 %v303, %v304
        %v306 = vmul.f32 %v305, %v305
        %v308 = vcombine.high %v306, %v306
        %vm310 = vcmask 1043456
        %v311 = vsel %vm310, %v306, 0.0
        %v312 = vrot.slane %v311, 4
        %v313 = vadd.f32 %v311, %v312
        %v314 = vrot.slane %v313, 2
        %v315 = vadd.f32 %v313, %v314
        %v316 = vrot.slane %v315, 1
        %v317 = vadd.f32 %v315, %v316
        %v318 = vsel %vm310, %v308, 0.0
        %v319 = vrot.slane %v318, 4
        %v320 = vadd.f32 %v318, %v319
        %v321 = vrot.slane %v320, 2
        %v322 = vadd.f32 %v320, %v321
        %v323 = vrot.slane %v322, 1
        %v324 = vadd.f32 %v322, %v323
        %v326 = vcombine.high %v303, %v303
        %v328 = vsel %vm310, %v303, -inf
        %v329 = vrot.slane %v328, 4
        %v330 = vmax.f32 %v328, %v329
        %v331 = vrot.slane %v330, 2
        %v332 = vmax.f32 %v330, %v331
        %v333 = vrot.slane %v332, 1
        %v334 = vmax.f32 %v332, %v333
        %v335 = vsel %vm310, %v326, -inf
        %v336 = vrot.slane %v335, 4
        %v337 = vmax.f32 %v335, %v336
        %v338 = vrot.slane %v337, 2
        %v339 = vmax.f32 %v337, %v338
        %v340 = vrot.slane %v339, 1
        %v341 = vmax.f32 %v339, %v340
        %v343 = vcombine.high %v304, %v304
        %v345 = vsel %vm310, %v304, -inf
        %v346 = vrot.slane %v345, 4
        %v347 = vmax.f32 %v345, %v346
        %v348 = vrot.slane %v347, 2
        %v349 = vmax.f32 %v347, %v348
        %v350 = vrot.slane %v349, 1
        %v351 = vmax.f32 %v349, %v350
        %v352 = vsel %vm310, %v343, -inf
        %v353 = vrot.slane %v352, 4
        %v354 = vmax.f32 %v352, %v353
        %v355 = vrot.slane %v354, 2
        %v356 = vmax.f32 %v354, %v355
        %v357 = vrot.slane %v356, 1
        %v358 = vmax.f32 %v356, %v357
        %v361 = vcombine.low %v334, %v341
        %v363 = vsub.f32 %v303, %v361
        %v364 = vmul.f32 %v363, 1.442695
        %v365 = vpow.pop %v364
        %v367 = vcombine.high %v365, %v365
        %v369 = vsel %vm310, %v365, 0.0
        %v370 = vrot.slane %v369, 4
        %v371 = vadd.f32 %v369, %v370
        %v372 = vrot.slane %v371, 2
        %v373 = vadd.f32 %v371, %v372
        %v374 = vrot.slane %v373, 1
        %v375 = vadd.f32 %v373, %v374
        %v376 = vsel %vm310, %v367, 0.0
        %v377 = vrot.slane %v376, 4
        %v378 = vadd.f32 %v376, %v377
        %v379 = vrot.slane %v378, 2
        %v380 = vadd.f32 %v378, %v379
        %v381 = vrot.slane %v380, 1
        %v382 = vadd.f32 %v380, %v381
        %v385 = vcombine.low %v351, %v358
        %v387 = vsub.f32 %v304, %v385
        %v388 = vmul.f32 %v387, 1.442695
        %v389 = vpow.pop %v388
        %v391 = vcombine.high %v389, %v389
        %v393 = vsel %vm310, %v389, 0.0
        %v394 = vrot.slane %v393, 4
        %v395 = vadd.f32 %v393, %v394
        %v396 = vrot.slane %v395, 2
        %v397 = vadd.f32 %v395, %v396
        %v398 = vrot.slane %v397, 1
        %v399 = vadd.f32 %v397, %v398
        %v400 = vsel %vm310, %v391, 0.0
        %v401 = vrot.slane %v400, 4
        %v402 = vadd.f32 %v400, %v401
        %v403 = vrot.slane %v402, 2
        %v404 = vadd.f32 %v402, %v403
        %v405 = vrot.slane %v404, 1
        %v406 = vadd.f32 %v404, %v405
        %v407 = vmul.f32 %v389, %v305
        %v409 = vcombine.high %v407, %v407
        %v411 = vsel %vm310, %v407, 0.0
        %v412 = vrot.slane %v411, 4
        %v413 = vadd.f32 %v411, %v412
        %v414 = vrot.slane %v413, 2
        %v415 = vadd.f32 %v413, %v414
        %v416 = vrot.slane %v415, 1
        %v417 = vadd.f32 %v415, %v416
        %v418 = vsel %vm310, %v409, 0.0
        %v419 = vrot.slane %v418, 4
        %v420 = vadd.f32 %v418, %v419
        %v421 = vrot.slane %v420, 2
        %v422 = vadd.f32 %v420, %v421
        %v423 = vrot.slane %v422, 1
        %v424 = vadd.f32 %v422, %v423
        %v425 = vsub.f32 %v334, %v351
        %v426 = vsub.f32 %v341, %v358
        %v427 = vmul.f32 %v425, %v399
        %v428 = vmul.f32 %v426, %v406
        %v429 = vsub.f32 %v427, %v417
        %v430 = vsub.f32 %v428, %v424
        %v431 = vrcp.pop %v399
        %v432 = vrcp.pop %v406
        %v433 = vmul.f32 %v429, %v431
        %v434 = vmul.f32 %v430, %v432
        %v435 = vmul.f32 %v375, %v431
        %v436 = vmul.f32 %v382, %v432
        %v437 = vlog2.pop %v435
        %v438 = vmul.f32 %v437, 0.6931472
        %v439 = vlog2.pop %v436
        %v440 = vmul.f32 %v439, 0.6931472
        %v441 = vadd.f32 %v433, %v438
        %v442 = vadd.f32 %v434, %v440
        %v443 = vld [vmem:[%s277] sm:$0x3]
        %v446 = vcombine.low %v441, %v442
        %v448 = vunpack.c.l.s4 1966171168
        %v449 = vunpack.c.0.s8 %v448
        %v450 = vlaneseq
        %v451 = vshrl.u32 %v450, 7
        %v452 = vsub.s32 %v449, %v451
        %v453 = vrot.slane %v446, %v452
        %v455 = vunpack.c.l.s4 1966171168
        %v456 = vunpack.c.0.s8 %v455
        %v457 = vlaneseq
        %v458 = vshrl.u32 %v457, 7
        %v459 = vsub.s32 %v456, %v458
        %v460 = vrot.slane %v453, %v459
        %v462 = vadd.f32 %v443, %v460
        %v463 = vlaneseq
        %vm464 = vcmp.ge.s32.totalorder %v463, 0
        %vm465 = vcmp.lt.s32.totalorder %v463, 256
        %vm466 = vmand %vm464, %vm465
        %467 = vst.msk [vmem:[%s277] sm:$0x3] %vm466, %v462
        %v468 = vld [vmem:[%s284] sm:$0x3]
        %v471 = vcombine.low %v317, %v324
        %v473 = vunpack.c.l.s4 1966171168
        %v474 = vunpack.c.0.s8 %v473
        %v475 = vlaneseq
        %v476 = vshrl.u32 %v475, 7
        %v477 = vsub.s32 %v474, %v476
        %v478 = vrot.slane %v471, %v477
        %v480 = vunpack.c.l.s4 1966171168
        %v481 = vunpack.c.0.s8 %v480
        %v482 = vlaneseq
        %v483 = vshrl.u32 %v482, 7
        %v484 = vsub.s32 %v481, %v483
        %v485 = vrot.slane %v478, %v484
        %v487 = vadd.f32 %v468, %v485
        %488 = vst.msk [vmem:[%s284] sm:$0x3] %vm466, %v487
        %s489 = sand.u32 %s124, 1
        %s490 = scalar_lea.sflag [#allocation4], %s489
        %s491 = sand.u32 %s124, 1
        %s492 = smul.addr %s491, 2
        %s493 = scalar_lea.vmem [#allocation7], %s492
        %s494 = sand.u32 %s152, 1
        %s495 = scalar_lea.sflag [#allocation9], %s494
        %s496 = sand.u32 %s152, 1
        %s497 = smul.addr %s496, 2
        %s498 = scalar_lea.vmem [#allocation8], %s497
        // Predicated region
        $region41: #{tpu_custom_call.1} parent=27 // pred_check
          %p499 = pneg %p134
        $region42: #{tpu_custom_call.1} parent=27 // pred_check_branch
          %501 = sbr.rel (%p499) target = $region44
        $region43: #{tpu_custom_call.1} parent=27 // pred_region
          %s503 = ssub.s32 32, 32
          %504 = vsyncadd %s490, %s503
          %s505 = smul.addr %s33, 2
          %s506 = smul.addr %s32, 2
          %s507 = sadd.s32 %s505, %s506
          %s508 = smul.addr %s507, 16
          %s509 = scalar_lea.hbm %s2, %s508
          %s511 = sshll.u32 %s493, 4
          %s512 = int_to_ptr.vmem [resolvable:$true] %s511
          %514 = dma.vmem_to_hbm [thread:$0]  %s512, 32, %s509, %s490
        $region44: #{tpu_custom_call.1} parent=27 // pred_fallthru
          _
        // Predicated region
        $region45: #{tpu_custom_call.1} parent=27 // pred_check
          %p515 = pneg %p162
        $region46: #{tpu_custom_call.1} parent=27 // pred_check_branch
          %517 = sbr.rel (%p515) target = $region48
        $region47: #{tpu_custom_call.1} parent=27 // pred_region
          %s519 = ssub.s32 32, 32
          %520 = vsyncadd %s495, %s519
          %s521 = smul.addr %s33, 2
          %s522 = smul.addr %s32, 2
          %s523 = sadd.s32 %s521, %s522
          %s524 = smul.addr %s523, 16
          %s525 = scalar_lea.hbm %s3, %s524
          %s527 = sshll.u32 %s498, 4
          %s528 = int_to_ptr.vmem [resolvable:$true] %s527
          %530 = dma.vmem_to_hbm [thread:$0]  %s528, 32, %s525, %s495
        $region48: #{tpu_custom_call.1} parent=27 // pred_fallthru
          _
      $region28: #{tpu_custom_call.1} parent=5 // pred_fallthru
        _
      %p531 = scmp.le.s32.totalorder 2, %s22
      // Predicated region
      $region49: #{tpu_custom_call.1} parent=5 // pred_check
        %p532 = pneg %p531
      $region50: #{tpu_custom_call.1} parent=5 // pred_check_branch
        %534 = sbr.rel (%p532) target = $region52
      $region51: #{tpu_custom_call.1} parent=5 // pred_region
        %s535 = ssub.s32 %s22, 2
        // Predicated region
        $region53: #{tpu_custom_call.1} parent=51 // pred_check
          %p536 = pneg %p140
        $region54: #{tpu_custom_call.1} parent=51 // pred_check_branch
          %538 = sbr.rel (%p536) target = $region56
        $region55: #{tpu_custom_call.1} parent=51 // pred_region
          %s539 = sand.u32 %s125, 1
          %s540 = scalar_lea.sflag [#allocation4], %s539
          %s541 = sand.u32 %s125, 1
          %s542 = smul.addr %s541, 2
          %s543 = scalar_lea.vmem [#allocation7], %s542
          %544 = dma.done %s540, 32
        $region56: #{tpu_custom_call.1} parent=51 // pred_fallthru
          _
        // Predicated region
        $region57: #{tpu_custom_call.1} parent=51 // pred_check
          %p545 = pneg %p168
        $region58: #{tpu_custom_call.1} parent=51 // pred_check_branch
          %547 = sbr.rel (%p545) target = $region60
        $region59: #{tpu_custom_call.1} parent=51 // pred_region
          %s548 = sand.u32 %s153, 1
          %s549 = scalar_lea.sflag [#allocation9], %s548
          %s550 = sand.u32 %s153, 1
          %s551 = smul.addr %s550, 2
          %s552 = scalar_lea.vmem [#allocation8], %s551
          %553 = dma.done %s549, 32
        $region60: #{tpu_custom_call.1} parent=51 // pred_fallthru
          _
      $region52: #{tpu_custom_call.1} parent=5 // pred_fallthru
        _
    $region6: #{tpu_custom_call.1} parent=1 // loop_footer
      %s26 = sadd.s32 1, %s22
    $region7: #{tpu_custom_call.1} parent=1 // loop_footer_branch
      %21 = sbr.rel target = $region3
    $region8: #{tpu_custom_call.1} parent=1 // loop_exit
      _
    %554 = vsyncpa [#allocation3], 1
    %s555 = scalar_lea.sflag [#allocation3], 1
    %556 = vsyncpa %s555, 1
    %557 = vsyncpa [#allocation6], 1
    %s558 = scalar_lea.sflag [#allocation6], 1
    %559 = vsyncpa %s558, 1
    %560 = vsyncpa [#allocation4], 1
    %s561 = scalar_lea.sflag [#allocation4], 1
    %562 = vsyncpa %s561, 1
    %563 = vsyncpa [#allocation9], 1
    %s564 = scalar_lea.sflag [#allocation9], 1
    %565 = vsyncpa %s564, 1

</llo_original>
